<compile_context>
chip_gen: v6e
topology: v6e:2x2x1
jax: 0.10.0
libtpu: 0.0.40
codegen_flags: <defaults>
</compile_context>

<pallas_src>
import jax
import jax.numpy as jnp
from jax import lax
from jax.experimental import pallas as pl
from jax.experimental.pallas import tpu as pltpu


def _round_up(x, m):
    return ((x + m - 1) // m) * m


# ---------------------------------------------------------------------------
# Pallas kernel: fused 3-layer MLP (two hidden ReLU layers + linear head).
# One grid step processes tile_b batch rows; all weights are VMEM-resident.
# ---------------------------------------------------------------------------
def _critic_kernel(obs_ref, act_ref, w1o_ref, w1a_ref, b1_ref,
                   w2_ref, b2_ref, w3t_ref, b3_ref, out_ref):
    # Layer 1: split matmul over (obs, action) replaces the wrapper concat.
    h = jnp.dot(obs_ref[...], w1o_ref[...], preferred_element_type=jnp.float32)
    h = h + jnp.dot(act_ref[...], w1a_ref[...],
                    preferred_element_type=jnp.float32)
    h = jnp.maximum(h + b1_ref[...], 0.0)

    # Layer 2: Linear + ReLU (MXU).
    h = jnp.dot(h, w2_ref[...], preferred_element_type=jnp.float32)
    h = jnp.maximum(h + b2_ref[...], 0.0)

    # Head (H2 -> 1): contract w3t [1, H2] against h's last dim directly
    # (no explicit h.T materialization / per-step XLU transpose).  Result is
    # a lane-dense [1, tile_b] row with the batch on the lane axis.
    q_row = lax.dot_general(
        w3t_ref[...], h,
        dimension_numbers=(((1,), (1,)), ((), ())),
        preferred_element_type=jnp.float32)                     # [1, tile_b]
    out_ref[0] = (q_row + b3_ref[...]).astype(out_ref.dtype)    # (1, tile_b)


# ---------------------------------------------------------------------------
# Wrapper: batch tiling (128-aligned, >=2 tiles when possible), lane-dense
# output reshape, no HBM padding pass for large batches.
# ---------------------------------------------------------------------------
def critic_forward(obs, action, params, *, tile_b=4096):
    """Q(obs, action) -> [B, 1]."""
    w1o, w1a, b1, w2, b2, w3t, b3 = params
    B, obs_dim = obs.shape
    act_dim = action.shape[1]
    h1 = w1o.shape[1]
    h2 = w2.shape[1]

    if B >= 128:
        # Big batch: 128-aligned tile (lane-dense output), no HBM pad; ragged
        # last tile handled by Pallas boundary blocks (row-independent MLP).
        tb = _round_up(min(tile_b, 4096), 128)
        if B > 128:
            # Keep >= 2 grid steps so v7x's two TensorCores both get work.
            tb = min(tb, _round_up(pl.cdiv(B, 2), 128))
        tb = max(tb, 128)
        pad_b = 0
    else:
        # Tiny batch: 8-sublane alignment; pad cost here is negligible.
        tb = max(8, _round_up(B, 8))
        pad_b = tb - B
        if pad_b:
            obs = jnp.pad(obs, ((0, pad_b), (0, 0)))
            action = jnp.pad(action, ((0, pad_b), (0, 0)))

    num_tiles = pl.cdiv(B + pad_b, tb)
    rows = num_tiles * tb

    flops = 2 * rows * ((obs_dim + act_dim) * h1 + h1 * h2 + h2 * 1)
    bytes_accessed = 4 * (obs.size + action.size + w1o.size + w1a.size
                          + b1.size + w2.size + b2.size + w3t.size + b3.size
                          + rows)

    const = lambda i: (0, 0)  # weights/biases: same block every step (resident)

    out = pl.pallas_call(
        _critic_kernel,
        out_shape=jax.ShapeDtypeStruct((num_tiles, 1, tb), jnp.float32),
        grid_spec=pltpu.PrefetchScalarGridSpec(
            num_scalar_prefetch=0,
            grid=(num_tiles,),
            in_specs=[
                pl.BlockSpec((tb, obs_dim), lambda i: (i, 0)),   # obs tile
                pl.BlockSpec((tb, act_dim), lambda i: (i, 0)),   # act tile
                pl.BlockSpec((obs_dim, h1), const),              # W1_obs
                pl.BlockSpec((act_dim, h1), const),              # W1_act
                pl.BlockSpec((1, h1), const),                    # b1
                pl.BlockSpec((h1, h2), const),                   # W2
                pl.BlockSpec((1, h2), const),                    # b2
                pl.BlockSpec((1, h2), const),                    # W3^T
                pl.BlockSpec((1, 1), const),                     # b3
            ],
            out_specs=pl.BlockSpec((1, 1, tb), lambda i: (i, 0, 0)),
        ),
        compiler_params=pltpu.CompilerParams(
            dimension_semantics=("parallel",),      # shard batch tiles on v7x
            vmem_limit_bytes=32 * 1024 * 1024,      # safe on v5e/v6e/v7x
        ),
        cost_estimate=pl.CostEstimate(
            flops=flops, transcendentals=0, bytes_accessed=bytes_accessed),
    )(obs, action, w1o, w1a, b1, w2, b2, w3t, b3)

    # (num_tiles, 1, tb) row-major == batch order; back to [B, 1].
    return out.reshape(rows, 1)[:B]


# ---------------------------------------------------------------------------
# Deterministic parameter init (mirrors the PyTorch __init__; default config:
# relu activation, no layer-norm, no dropout, exactly two hidden layers).
# ---------------------------------------------------------------------------
def init_critic_params(key, obs_dim, action_dim, hidden_dims):
    assert len(hidden_dims) == 2, "fused kernel implements the 2-hidden-layer Critic"
    in_dim = obs_dim + action_dim
    h1, h2 = hidden_dims
    k1, k2, k3w, k3b = jax.random.split(key, 4)

    # Hidden layers: xavier_uniform_ weight, zeros bias.
    lim1 = (6.0 / (in_dim + h1)) ** 0.5
    w1 = jax.random.uniform(k1, (in_dim, h1), minval=-lim1, maxval=lim1,
                            dtype=jnp.float32)
    b1 = jnp.zeros((1, h1), jnp.float32)
    lim2 = (6.0 / (h1 + h2)) ** 0.5
    w2 = jax.random.uniform(k2, (h1, h2), minval=-lim2, maxval=lim2,
                            dtype=jnp.float32)
    b2 = jnp.zeros((1, h2), jnp.float32)

    # Output layer: uniform_(-0.003, 0.003) for weight and bias.
    w3 = jax.random.uniform(k3w, (h2, 1), minval=-0.003, maxval=0.003,
                            dtype=jnp.float32)
    b3 = jax.random.uniform(k3b, (1, 1), minval=-0.003, maxval=0.003,
                            dtype=jnp.float32)

    # Kernel-friendly layout: W1 split by (obs, action) rows, W3 transposed.
    w1o, w1a = w1[:obs_dim], w1[obs_dim:]
    w3t = w3.T                                   # [1, h2]
    return (w1o, w1a, b1, w2, b2, w3t, b3)


def critic_reference(obs, action, params):
    """Pure-JAX reference of the same forward pass (for correctness check)."""
    w1o, w1a, b1, w2, b2, w3t, b3 = params
    x = jnp.concatenate([obs, action], axis=1)
    w1 = jnp.concatenate([w1o, w1a], axis=0)
    h = jnp.maximum(x @ w1 + b1, 0.0)
    h = jnp.maximum(h @ w2 + b2, 0.0)
    return h @ w3t.T + b3


# TODO(synk): LayerNorm / Dropout branches of MLP are disabled in the default
# Critic config (use_layer_norm=False, dropout=0.0) and are not implemented.

if __name__ == "__main__":
    # Small shapes consistent with the Critic forward.
    B, OBS_DIM, ACT_DIM = 8, 16, 8
    HIDDEN_DIMS = [32, 32]

    key = jax.random.PRNGKey(0)
    k_obs, k_act, k_params = jax.random.split(key, 3)

    obs = jax.random.normal(k_obs, (B, OBS_DIM), dtype=jnp.float32)
    action = jax.random.normal(k_act, (B, ACT_DIM), dtype=jnp.float32)
    params = init_critic_params(k_params, OBS_DIM, ACT_DIM, HIDDEN_DIMS)

    q = jax.jit(critic_forward)(obs, action, params)
    q = jax.block_until_ready(q)

    # Silent correctness check against the pure-JAX reference.
    q_ref = critic_reference(obs, action, params)
    assert q.shape == (B, 1)
    assert jnp.allclose(q, q_ref, atol=1e-5, rtol=1e-5)

    print("KERNEL_OK")
</pallas_src>

<mosaic_0001>
module attributes {stable_mosaic.version = 11 : i64} {
  func.func @_critic_kernel(%arg0: i32, %arg1: memref<8x16xf32, #tpu.memory_space<vmem>>, %arg2: memref<8x8xf32, #tpu.memory_space<vmem>>, %arg3: memref<16x32xf32, #tpu.memory_space<vmem>>, %arg4: memref<8x32xf32, #tpu.memory_space<vmem>>, %arg5: memref<1x32xf32, #tpu.memory_space<vmem>>, %arg6: memref<32x32xf32, #tpu.memory_space<vmem>>, %arg7: memref<1x32xf32, #tpu.memory_space<vmem>>, %arg8: memref<1x32xf32, #tpu.memory_space<vmem>>, %arg9: memref<1x1xf32, #tpu.memory_space<vmem>>, %arg10: memref<1x1x8xf32, #tpu.memory_space<vmem>>) attributes {dimension_semantics = [#tpu.dimension_semantics<parallel>], iteration_bounds = array<i64: 1>, scalar_prefetch = 0 : i64, scratch_operands = 0 : i64, tpu.core_type = #tpu.core_type<tc>, window_params = [{transform_indices = @transform_0, window_bounds = array<i64: 8, 16>}, {transform_indices = @transform_1, window_bounds = array<i64: 8, 8>}, {pipeline_mode = #tpu.pipeline_mode<synchronous>, transform_indices = @transform_2, window_bounds = array<i64: 16, 32>}, {pipeline_mode = #tpu.pipeline_mode<synchronous>, transform_indices = @transform_3, window_bounds = array<i64: 8, 32>}, {pipeline_mode = #tpu.pipeline_mode<synchronous>, transform_indices = @transform_4, window_bounds = array<i64: 1, 32>}, {pipeline_mode = #tpu.pipeline_mode<synchronous>, transform_indices = @transform_5, window_bounds = array<i64: 32, 32>}, {pipeline_mode = #tpu.pipeline_mode<synchronous>, transform_indices = @transform_6, window_bounds = array<i64: 1, 32>}, {pipeline_mode = #tpu.pipeline_mode<synchronous>, transform_indices = @transform_7, window_bounds = array<i64: 1, 32>}, {pipeline_mode = #tpu.pipeline_mode<synchronous>, transform_indices = @transform_8, window_bounds = array<i64: 1, 1>}, {transform_indices = @transform_9, window_bounds = array<i64: 1, 1, 8>}]} {
    %c0 = arith.constant 0 : index
    %c0_0 = arith.constant 0 : index
    %0 = vector.load %arg1[%c0, %c0_0] : memref<8x16xf32, #tpu.memory_space<vmem>>, vector<8x16xf32>
    %c0_1 = arith.constant 0 : index
    %c0_2 = arith.constant 0 : index
    %1 = vector.load %arg3[%c0_1, %c0_2] : memref<16x32xf32, #tpu.memory_space<vmem>>, vector<16x32xf32>
    %cst = arith.constant dense<0.000000e+00> : vector<8x32xf32>
    %2 = tpu.matmul %0, %1, %cst {dimension_numbers = #tpu.dot_dimension_numbers<[1], [0], [0], [1], [0, 0, 1, 1], [], []>} : vector<8x16xf32>, vector<16x32xf32>, vector<8x32xf32> -> vector<8x32xf32>
    %c0_3 = arith.constant 0 : index
    %c0_4 = arith.constant 0 : index
    %3 = vector.load %arg2[%c0_3, %c0_4] : memref<8x8xf32, #tpu.memory_space<vmem>>, vector<8x8xf32>
    %c0_5 = arith.constant 0 : index
    %c0_6 = arith.constant 0 : index
    %4 = vector.load %arg4[%c0_5, %c0_6] : memref<8x32xf32, #tpu.memory_space<vmem>>, vector<8x32xf32>
    %cst_7 = arith.constant dense<0.000000e+00> : vector<8x32xf32>
    %5 = tpu.matmul %3, %4, %cst_7 {dimension_numbers = #tpu.dot_dimension_numbers<[1], [0], [0], [1], [0, 0, 1, 1], [], []>} : vector<8x8xf32>, vector<8x32xf32>, vector<8x32xf32> -> vector<8x32xf32>
    %6 = arith.addf %2, %5 : vector<8x32xf32>
    %c0_8 = arith.constant 0 : index
    %c0_9 = arith.constant 0 : index
    %7 = vector.load %arg5[%c0_8, %c0_9] : memref<1x32xf32, #tpu.memory_space<vmem>>, vector<1x32xf32>
    %8 = vector.broadcast %7 : vector<1x32xf32> to vector<8x32xf32>
    %9 = arith.addf %6, %8 : vector<8x32xf32>
    %cst_10 = arith.constant 0.000000e+00 : f32
    %10 = vector.broadcast %cst_10 : f32 to vector<8x32xf32>
    %11 = arith.maximumf %9, %10 : vector<8x32xf32>
    %c0_11 = arith.constant 0 : index
    %c0_12 = arith.constant 0 : index
    %12 = vector.load %arg6[%c0_11, %c0_12] : memref<32x32xf32, #tpu.memory_space<vmem>>, vector<32x32xf32>
    %cst_13 = arith.constant dense<0.000000e+00> : vector<8x32xf32>
    %13 = tpu.matmul %11, %12, %cst_13 {dimension_numbers = #tpu.dot_dimension_numbers<[1], [0], [0], [1], [0, 0, 1, 1], [], []>} : vector<8x32xf32>, vector<32x32xf32>, vector<8x32xf32> -> vector<8x32xf32>
    %c0_14 = arith.constant 0 : index
    %c0_15 = arith.constant 0 : index
    %14 = vector.load %arg7[%c0_14, %c0_15] : memref<1x32xf32, #tpu.memory_space<vmem>>, vector<1x32xf32>
    %15 = vector.broadcast %14 : vector<1x32xf32> to vector<8x32xf32>
    %16 = arith.addf %13, %15 : vector<8x32xf32>
    %cst_16 = arith.constant 0.000000e+00 : f32
    %17 = vector.broadcast %cst_16 : f32 to vector<8x32xf32>
    %18 = arith.maximumf %16, %17 : vector<8x32xf32>
    %c0_17 = arith.constant 0 : index
    %c0_18 = arith.constant 0 : index
    %19 = vector.load %arg8[%c0_17, %c0_18] : memref<1x32xf32, #tpu.memory_space<vmem>>, vector<1x32xf32>
    %cst_19 = arith.constant dense<0.000000e+00> : vector<1x8xf32>
    %20 = tpu.matmul %19, %18, %cst_19 {dimension_numbers = #tpu.dot_dimension_numbers<[1], [1], [0], [0], [0, 0, 1, 0], [], []>} : vector<1x32xf32>, vector<8x32xf32>, vector<1x8xf32> -> vector<1x8xf32>
    %c0_20 = arith.constant 0 : index
    %c0_21 = arith.constant 0 : index
    %21 = vector.load %arg9[%c0_20, %c0_21] : memref<1x1xf32, #tpu.memory_space<vmem>>, vector<1x1xf32>
    %22 = vector.broadcast %21 : vector<1x1xf32> to vector<1x8xf32>
    %23 = arith.addf %20, %22 : vector<1x8xf32>
    %c0_22 = arith.constant 0 : index
    %c0_23 = arith.constant 0 : index
    %c0_24 = arith.constant 0 : index
    %24 = vector.load %arg10[%c0_22, %c0_23, %c0_24] : memref<1x1x8xf32, #tpu.memory_space<vmem>>, vector<1x1x8xf32>
    %25 = vector.shape_cast %24 : vector<1x1x8xf32> to vector<1x8xf32>
    %26 = vector.shape_cast %23 : vector<1x8xf32> to vector<1x1x8xf32>
    tpu.vector_store %arg10[%c0_22, %c0_23, %c0_24], %26 {strides = array<i32>} : memref<1x1x8xf32, #tpu.memory_space<vmem>>, vector<1x1x8xf32>,
    return
  }
  func.func @transform_0(%arg0: i32) -> (i32, i32) {
    %c0_i32 = arith.constant 0 : i32
    %c0_i32_0 = arith.constant 0 : i32
    return %arg0, %c0_i32 : i32, i32
  }
  func.func @transform_1(%arg0: i32) -> (i32, i32) {
    %c0_i32 = arith.constant 0 : i32
    %c0_i32_0 = arith.constant 0 : i32
    return %arg0, %c0_i32 : i32, i32
  }
  func.func @transform_2(%arg0: i32) -> (i32, i32) {
    %c0_i32 = arith.constant 0 : i32
    %c0_i32_0 = arith.constant 0 : i32
    %c0_i32_1 = arith.constant 0 : i32
    return %c0_i32, %c0_i32_0 : i32, i32
  }
  func.func @transform_3(%arg0: i32) -> (i32, i32) {
    %c0_i32 = arith.constant 0 : i32
    %c0_i32_0 = arith.constant 0 : i32
    %c0_i32_1 = arith.constant 0 : i32
    return %c0_i32, %c0_i32_0 : i32, i32
  }
  func.func @transform_4(%arg0: i32) -> (i32, i32) {
    %c0_i32 = arith.constant 0 : i32
    %c0_i32_0 = arith.constant 0 : i32
    %c0_i32_1 = arith.constant 0 : i32
    return %c0_i32, %c0_i32_0 : i32, i32
  }
  func.func @transform_5(%arg0: i32) -> (i32, i32) {
    %c0_i32 = arith.constant 0 : i32
    %c0_i32_0 = arith.constant 0 : i32
    %c0_i32_1 = arith.constant 0 : i32
    return %c0_i32, %c0_i32_0 : i32, i32
  }
  func.func @transform_6(%arg0: i32) -> (i32, i32) {
    %c0_i32 = arith.constant 0 : i32
    %c0_i32_0 = arith.constant 0 : i32
    %c0_i32_1 = arith.constant 0 : i32
    return %c0_i32, %c0_i32_0 : i32, i32
  }
  func.func @transform_7(%arg0: i32) -> (i32, i32) {
    %c0_i32 = arith.constant 0 : i32
    %c0_i32_0 = arith.constant 0 : i32
    %c0_i32_1 = arith.constant 0 : i32
    return %c0_i32, %c0_i32_0 : i32, i32
  }
  func.func @transform_8(%arg0: i32) -> (i32, i32) {
    %c0_i32 = arith.constant 0 : i32
    %c0_i32_0 = arith.constant 0 : i32
    %c0_i32_1 = arith.constant 0 : i32
    return %c0_i32, %c0_i32_0 : i32, i32
  }
  func.func @transform_9(%arg0: i32) -> (i32, i32, i32) {
    %c0_i32 = arith.constant 0 : i32
    %c0_i32_0 = arith.constant 0 : i32
    %c0_i32_1 = arith.constant 0 : i32
    return %arg0, %c0_i32, %c0_i32_0 : i32, i32, i32
  }
}

</mosaic_0001>

<llo_original>
// kernel: critic_forward.1
$region0: #{critic_forward.1}
  #allocation0 [shape = 'u32[]', space=smem, size = 0x4, offset = 0x4, fixed_abs, tag = 'smem constant byte address 0x4 - core index']
  #allocation1 [shape = 'u32[144,128]{1,0:T(1,128)}', space=vmem, size = 0x12000, scoped, tag = 'internal scratch']
  #allocation2 [shape = 'f32[1,1]{1,0:T(1,128)S(1)}', space=vmem, size = 0x200, scoped, tag = 'scoped memory for critic_forward.1']
  %s0 = inlined_call_operand.hbm [shape: f32[8,16], index: 0, kind: input, shape index: {}]
  %s1 = inlined_call_operand.hbm [shape: f32[8,8], index: 1, kind: input, shape index: {}]
  %s2 = inlined_call_operand.hbm [shape: f32[16,32], index: 2, kind: input, shape index: {}]
  %s3 = inlined_call_operand.hbm [shape: f32[8,32], index: 3, kind: input, shape index: {}]
  %s4 = inlined_call_operand.vmem [shape: f32[1,32], index: 4, kind: input, shape index: {}]
  %s5 = inlined_call_operand.hbm [shape: f32[32,32], index: 5, kind: input, shape index: {}]
  %s6 = inlined_call_operand.vmem [shape: f32[1,32], index: 6, kind: input, shape index: {}]
  %s7 = inlined_call_operand.vmem [shape: f32[1,32], index: 7, kind: input, shape index: {}]
  %s8 = inlined_call_operand.<no memory space> [shape: f32[1,1], index: 8, kind: input, shape index: {}]
  %s9 = inlined_call_operand.hbm [shape: f32[1,1,8], index: 9, kind: output, shape index: {}]
  %s10 = sld [smem:[#allocation0]]
  $region66: #{critic_forward.1} parent=0
    _
  %s12 = ssub.s32 1, %s10
  %s13 = scalar_select 0, %s12, %s10
  %v14 = vstv %s8
  %15 = vst [vmem:[#allocation2] sm:$0x1] %v14
  $region1: #{critic_forward.1} parent=0
    #allocation3 [shape = 'u8[4096]{0}', space=vmem, size = 0x1000, scoped, tag = 'input window, operand 0, single buffered']
    #allocation4 [shape = 's32[1]{0}', space=sflag, size = 0x4, scoped, tag = 'scoped memory for critic_forward.1']
    #allocation5 [shape = 's32[1]{0}', space=sflag, size = 0x4, scoped, tag = 'scoped memory for critic_forward.1']
    #allocation6 [shape = 'u8[4096]{0}', space=vmem, size = 0x1000, scoped, tag = 'input window, operand 1, single buffered']
    #allocation7 [shape = 's32[1]{0}', space=sflag, size = 0x4, scoped, tag = 'scoped memory for critic_forward.1']
    #allocation8 [shape = 'u8[8192]{0}', space=vmem, size = 0x2000, scoped, tag = 'input window, operand 2, single buffered']
    #allocation9 [shape = 'u8[4096]{0}', space=vmem, size = 0x1000, scoped, tag = 'input window, operand 3, single buffered']
    #allocation10 [shape = 's32[1]{0}', space=sflag, size = 0x4, scoped, tag = 'scoped memory for critic_forward.1']
    #allocation11 [shape = 'u8[16384]{0}', space=vmem, size = 0x4000, scoped, tag = 'input window, operand 5, single buffered']
    #allocation12 [shape = 'u8[512]{0}', space=vmem, size = 0x400, scoped, tag = 'output window, operand 0, single buffered']
    %16 = vsyncpa [#allocation4], 0
    %17 = vsyncpa [#allocation7], 0
    %18 = vsyncpa [#allocation10], 0
    %19 = vsyncpa [#allocation5], 0
    // Predicated region
    $region2: #{critic_forward.1} parent=1 // pred_check
      _
    $region3: #{critic_forward.1} parent=1 // pred_check_branch
      %21 = sbr.rel (0) target = $region5
    $region4: #{critic_forward.1} parent=1 // pred_region
      %s23 = ssub.s32 128, 128
      %24 = vsyncadd [#allocation4], %s23
      %s26 = sshll.u32 [#allocation3], 4
      %s27 = int_to_ptr.vmem [resolvable:$true] %s26
      %29 = dma.hbm_to_vmem [thread:$0]  %s0, 128, %s27, [#allocation4]
    $region5: #{critic_forward.1} parent=1 // pred_fallthru
      _
    // Predicated region
    $region6: #{critic_forward.1} parent=1 // pred_check
      _
    $region7: #{critic_forward.1} parent=1 // pred_check_branch
      %31 = sbr.rel (0) target = $region9
    $region8: #{critic_forward.1} parent=1 // pred_region
      %s33 = ssub.s32 128, 128
      %34 = vsyncadd [#allocation7], %s33
      %s36 = sshll.u32 [#allocation6], 4
      %s37 = int_to_ptr.vmem [resolvable:$true] %s36
      %39 = dma.hbm_to_vmem [thread:$0]  %s1, 128, %s37, [#allocation7]
    $region9: #{critic_forward.1} parent=1 // pred_fallthru
      _
    // Predicated region
    $region10: #{critic_forward.1} parent=1 // pred_check
      _
    $region11: #{critic_forward.1} parent=1 // pred_check_branch
      %41 = sbr.rel (0) target = $region13
    $region12: #{critic_forward.1} parent=1 // pred_region
      %s43 = ssub.s32 256, 256
      %44 = vsyncadd [#allocation7], %s43
      %s45 = sshll.u32 [#allocation8], 4
      %s46 = int_to_ptr.vmem [resolvable:$true] %s45
      %51 = dma.hbm_to_vmem [thread:$0]  %s2, 256, %s46, [#allocation7], 128, 128, 8
    $region13: #{critic_forward.1} parent=1 // pred_fallthru
      _
    // Predicated region
    $region14: #{critic_forward.1} parent=1 // pred_check
      _
    $region15: #{critic_forward.1} parent=1 // pred_check_branch
      %53 = sbr.rel (0) target = $region17
    $region16: #{critic_forward.1} parent=1 // pred_region
      %s55 = ssub.s32 128, 128
      %56 = vsyncadd [#allocation10], %s55
      %s58 = sshll.u32 [#allocation9], 4
      %s59 = int_to_ptr.vmem [resolvable:$true] %s58
      %61 = dma.hbm_to_vmem [thread:$0]  %s3, 128, %s59, [#allocation10]
    $region17: #{critic_forward.1} parent=1 // pred_fallthru
      _
    // Predicated region
    $region18: #{critic_forward.1} parent=1 // pred_check
      _
    $region19: #{critic_forward.1} parent=1 // pred_check_branch
      %63 = sbr.rel (0) target = $region21
    $region20: #{critic_forward.1} parent=1 // pred_region
      _
    $region21: #{critic_forward.1} parent=1 // pred_fallthru
      _
    // Predicated region
    $region22: #{critic_forward.1} parent=1 // pred_check
      _
    $region23: #{critic_forward.1} parent=1 // pred_check_branch
      %65 = sbr.rel (0) target = $region25
    $region24: #{critic_forward.1} parent=1 // pred_region
      %s67 = ssub.s32 512, 512
      %68 = vsyncadd [#allocation10], %s67
      %s69 = sshll.u32 [#allocation11], 4
      %s70 = int_to_ptr.vmem [resolvable:$true] %s69
      %75 = dma.hbm_to_vmem [thread:$0]  %s5, 512, %s70, [#allocation10], 128, 128, 8
    $region25: #{critic_forward.1} parent=1 // pred_fallthru
      _
    // Predicated region
    $region26: #{critic_forward.1} parent=1 // pred_check
      _
    $region27: #{critic_forward.1} parent=1 // pred_check_branch
      %77 = sbr.rel (0) target = $region29
    $region28: #{critic_forward.1} parent=1 // pred_region
      _
    $region29: #{critic_forward.1} parent=1 // pred_fallthru
      _
    // Predicated region
    $region30: #{critic_forward.1} parent=1 // pred_check
      _
    $region31: #{critic_forward.1} parent=1 // pred_check_branch
      %79 = sbr.rel (0) target = $region33
    $region32: #{critic_forward.1} parent=1 // pred_region
      _
    $region33: #{critic_forward.1} parent=1 // pred_fallthru
      _
    // Predicated region
    $region34: #{critic_forward.1} parent=1 // pred_check
      _
    $region35: #{critic_forward.1} parent=1 // pred_check_branch
      %81 = sbr.rel (0) target = $region37
    $region36: #{critic_forward.1} parent=1 // pred_region
      _
    $region37: #{critic_forward.1} parent=1 // pred_fallthru
      _
    // Predicated region
    $region38: #{critic_forward.1} parent=1 // pred_check
      _
    $region39: #{critic_forward.1} parent=1 // pred_check_branch
      %83 = sbr.rel (0) target = $region41
    $region40: #{critic_forward.1} parent=1 // pred_region
      %84 = dma.done [#allocation4], 128
    $region41: #{critic_forward.1} parent=1 // pred_fallthru
      _
    // Predicated region
    $region42: #{critic_forward.1} parent=1 // pred_check
      _
    $region43: #{critic_forward.1} parent=1 // pred_check_branch
      %86 = sbr.rel (0) target = $region45
    $region44: #{critic_forward.1} parent=1 // pred_region
      %87 = dma.done [#allocation7], 128
    $region45: #{critic_forward.1} parent=1 // pred_fallthru
      _
    // Predicated region
    $region46: #{critic_forward.1} parent=1 // pred_check
      _
    $region47: #{critic_forward.1} parent=1 // pred_check_branch
      %89 = sbr.rel (0) target = $region49
    $region48: #{critic_forward.1} parent=1 // pred_region
      %90 = dma.done [#allocation7], 256
    $region49: #{critic_forward.1} parent=1 // pred_fallthru
      _
    // Predicated region
    $region50: #{critic_forward.1} parent=1 // pred_check
      _
    $region51: #{critic_forward.1} parent=1 // pred_check_branch
      %92 = sbr.rel (0) target = $region53
    $region52: #{critic_forward.1} parent=1 // pred_region
      %93 = dma.done [#allocation10], 128
    $region53: #{critic_forward.1} parent=1 // pred_fallthru
      _
    // Predicated region
    $region54: #{critic_forward.1} parent=1 // pred_check
      _
    $region55: #{critic_forward.1} parent=1 // pred_check_branch
      %95 = sbr.rel (0) target = $region57
    $region56: #{critic_forward.1} parent=1 // pred_region
      %96 = dma.done [#allocation10], 512
    $region57: #{critic_forward.1} parent=1 // pred_fallthru
      _
    %v97 = vld [vmem:[#allocation3] sm:$0xff]
    %v98 = vld [vmem:[#allocation8] sm:$0xff]
    %v99 = vld [vmem:[#allocation8 + $0x8] sm:$0xff]
    %v100 = vld [vmem:[#allocation6] sm:$0xff]
    %v101 = vld [vmem:[#allocation9] sm:$0xff]
    %vm102 = vcmask 64512
    %v104 = vsel %vm102, %v100, 0
    %106 = vmatprep.subr.mxu0 0.0
    %107 = vmatpush1.msra.mxu0 0.0
    %108 = vmatprep.subr.mxu0 0.0
    %109 = vmatpush1.msra.mxu0 0.0
    %110 = vmatprep.subr.mxu0 0.0
    %111 = vmatpush1.msra.mxu0 0.0
    %112 = vmatprep.subr.mxu0 0.0
    %113 = vmatpush1.msra.mxu0 0.0
    %114 = vmatprep.subr.mxu0 0.0
    %115 = vmatpush1.msra.mxu0 0.0
    %116 = vmatprep.subr.mxu0 0.0
    %117 = vmatpush1.msra.mxu0 0.0
    %118 = vmatprep.subr.mxu0 0.0
    %119 = vmatpush1.msra.mxu0 0.0
    %120 = vmatprep.subr.mxu0 0.0
    %121 = vmatpush1.msra.mxu0 0.0
    %122 = vmatprep.subr.mxu0 0.0
    %123 = vmatpush1.msra.mxu0 0.0
    %124 = vmatprep.subr.mxu0 0.0
    %125 = vmatpush1.msra.mxu0 0.0
    %126 = vmatprep.subr.mxu0 0.0
    %127 = vmatpush1.msra.mxu0 0.0
    %128 = vmatprep.subr.mxu0 0.0
    %129 = vmatpush1.msra.mxu0 0.0
    %130 = vmatprep.subr.mxu0 0.0
    %131 = vmatpush1.msra.mxu0 0.0
    %132 = vmatprep.subr.mxu0 0.0
    %133 = vmatpush1.msra.mxu0 0.0
    %134 = vmatprep.subr.mxu0 0.0
    %135 = vmatpush1.msra.mxu0 0.0
    %136 = vmatprep.subr.mxu0 0.0
    %137 = vmatpush1.msra.mxu0 %v101
    %138 = vmatprep.subr.mxu0 0.0
    %139 = vmatpush2.msra.mxu0 0.0
    %140 = vmatprep.subr.mxu0 0.0
    %141 = vmatpush2.msra.mxu0 0.0
    %142 = vmatprep.subr.mxu0 0.0
    %143 = vmatpush2.msra.mxu0 0.0
    %144 = vmatprep.subr.mxu0 0.0
    %145 = vmatpush2.msra.mxu0 0.0
    %146 = vmatprep.subr.mxu0 0.0
    %147 = vmatpush2.msra.mxu0 0.0
    %148 = vmatprep.subr.mxu0 0.0
    %149 = vmatpush2.msra.mxu0 0.0
    %150 = vmatprep.subr.mxu0 0.0
    %151 = vmatpush2.msra.mxu0 0.0
    %152 = vmatprep.subr.mxu0 0.0
    %153 = vmatpush2.msra.mxu0 0.0
    %154 = vmatprep.subr.mxu0 0.0
    %155 = vmatpush2.msra.mxu0 0.0
    %156 = vmatprep.subr.mxu0 0.0
    %157 = vmatpush2.msra.mxu0 0.0
    %158 = vmatprep.subr.mxu0 0.0
    %159 = vmatpush2.msra.mxu0 0.0
    %160 = vmatprep.subr.mxu0 0.0
    %161 = vmatpush2.msra.mxu0 0.0
    %162 = vmatprep.subr.mxu0 0.0
    %163 = vmatpush2.msra.mxu0 0.0
    %164 = vmatprep.subr.mxu0 0.0
    %165 = vmatpush2.msra.mxu0 0.0
    %166 = vmatprep.subr.mxu0 0.0
    %167 = vmatpush2.msra.mxu0 0.0
    %168 = vmatprep.subr.mxu0 0.0
    %169 = vmatpush2.msra.mxu0 0.0
    %170 = vmatprep.mubr.f32.mxu0 0.0
    %171 = vmatmul.mubr.f32.gmra.mxu0 %v104
    %v172 = vpop.f32.mrf.mxu0
    %v173 = vadd.f32 0.0, %v172
    %v174 = vpop.f32.mrf.mxu0
    %175 = vdwg.mxu0
    %vm176 = vcmask 130048
    %v178 = vsel %vm176, %v97, 0
    %180 = vmatprep.subr.mxu0 0.0
    %181 = vmatpush1.msra.mxu0 0.0
    %182 = vmatprep.subr.mxu0 0.0
    %183 = vmatpush1.msra.mxu0 0.0
    %184 = vmatprep.subr.mxu0 0.0
    %185 = vmatpush1.msra.mxu0 0.0
    %186 = vmatprep.subr.mxu0 0.0
    %187 = vmatpush1.msra.mxu0 0.0
    %188 = vmatprep.subr.mxu0 0.0
    %189 = vmatpush1.msra.mxu0 0.0
    %190 = vmatprep.subr.mxu0 0.0
    %191 = vmatpush1.msra.mxu0 0.0
    %192 = vmatprep.subr.mxu0 0.0
    %193 = vmatpush1.msra.mxu0 0.0
    %194 = vmatprep.subr.mxu0 0.0
    %195 = vmatpush1.msra.mxu0 0.0
    %196 = vmatprep.subr.mxu0 0.0
    %197 = vmatpush1.msra.mxu0 0.0
    %198 = vmatprep.subr.mxu0 0.0
    %199 = vmatpush1.msra.mxu0 0.0
    %200 = vmatprep.subr.mxu0 0.0
    %201 = vmatpush1.msra.mxu0 0.0
    %202 = vmatprep.subr.mxu0 0.0
    %203 = vmatpush1.msra.mxu0 0.0
    %204 = vmatprep.subr.mxu0 0.0
    %205 = vmatpush1.msra.mxu0 0.0
    %206 = vmatprep.subr.mxu0 0.0
    %207 = vmatpush1.msra.mxu0 0.0
    %208 = vmatprep.subr.mxu0 0.0
    %209 = vmatpush1.msra.mxu0 %v99
    %210 = vmatprep.subr.mxu0 0.0
    %211 = vmatpush1.msra.mxu0 %v98
    %212 = vmatprep.subr.mxu0 0.0
    %213 = vmatpush2.msra.mxu0 0.0
    %214 = vmatprep.subr.mxu0 0.0
    %215 = vmatpush2.msra.mxu0 0.0
    %216 = vmatprep.subr.mxu0 0.0
    %217 = vmatpush2.msra.mxu0 0.0
    %218 = vmatprep.subr.mxu0 0.0
    %219 = vmatpush2.msra.mxu0 0.0
    %220 = vmatprep.subr.mxu0 0.0
    %221 = vmatpush2.msra.mxu0 0.0
    %222 = vmatprep.subr.mxu0 0.0
    %223 = vmatpush2.msra.mxu0 0.0
    %224 = vmatprep.subr.mxu0 0.0
    %225 = vmatpush2.msra.mxu0 0.0
    %226 = vmatprep.subr.mxu0 0.0
    %227 = vmatpush2.msra.mxu0 0.0
    %228 = vmatprep.subr.mxu0 0.0
    %229 = vmatpush2.msra.mxu0 0.0
    %230 = vmatprep.subr.mxu0 0.0
    %231 = vmatpush2.msra.mxu0 0.0
    %232 = vmatprep.subr.mxu0 0.0
    %233 = vmatpush2.msra.mxu0 0.0
    %234 = vmatprep.subr.mxu0 0.0
    %235 = vmatpush2.msra.mxu0 0.0
    %236 = vmatprep.subr.mxu0 0.0
    %237 = vmatpush2.msra.mxu0 0.0
    %238 = vmatprep.subr.mxu0 0.0
    %239 = vmatpush2.msra.mxu0 0.0
    %240 = vmatprep.subr.mxu0 0.0
    %241 = vmatpush2.msra.mxu0 0.0
    %242 = vmatprep.subr.mxu0 0.0
    %243 = vmatpush2.msra.mxu0 0.0
    %244 = vmatprep.mubr.f32.mxu0 0.0
    %245 = vmatmul.mubr.f32.gmra.mxu0 %v178
    %v246 = vpop.f32.mrf.mxu0
    %v247 = vadd.f32 %v173, %v246
    %v248 = vpop.f32.mrf.mxu0
    %249 = vdwg.mxu0
    %v250 = vld [vmem:[%s4] sm:$0x1]
    %v252 = vlaneseq
    %v253 = vshrl.u32 %v252, 7
    %v254 = vsub.s32 0, %v253
    %v255 = vrot.slane %v250, %v254
    %v257 = vadd.f32 %v247, %v255
    %v258 = vmax.f32 %v257, 0.0
    %v259 = vld [vmem:[#allocation11] sm:$0xff]
    %v260 = vld [vmem:[#allocation11 + $0x8] sm:$0xff]
    %v261 = vld [vmem:[#allocation11 + $0x10] sm:$0xff]
    %v262 = vld [vmem:[#allocation11 + $0x18] sm:$0xff]
    %v263 = vld [vmem:[%s6] sm:$0x1]
    %v265 = vlaneseq
    %v266 = vshrl.u32 %v265, 7
    %v267 = vsub.s32 0, %v266
    %v268 = vrot.slane %v263, %v267
    %vm270 = vcmask 261120
    %v272 = vsel %vm270, %v258, 0
    %274 = vmatprep.subr.mxu0 0.0
    %275 = vmatpush1.msra.mxu0 0.0
    %276 = vmatprep.subr.mxu0 0.0
    %277 = vmatpush1.msra.mxu0 0.0
    %278 = vmatprep.subr.mxu0 0.0
    %279 = vmatpush1.msra.mxu0 0.0
    %280 = vmatprep.subr.mxu0 0.0
    %281 = vmatpush1.msra.mxu0 0.0
    %282 = vmatprep.subr.mxu0 0.0
    %283 = vmatpush1.msra.mxu0 0.0
    %284 = vmatprep.subr.mxu0 0.0
    %285 = vmatpush1.msra.mxu0 0.0
    %286 = vmatprep.subr.mxu0 0.0
    %287 = vmatpush1.msra.mxu0 0.0
    %288 = vmatprep.subr.mxu0 0.0
    %289 = vmatpush1.msra.mxu0 0.0
    %290 = vmatprep.subr.mxu0 0.0
    %291 = vmatpush1.msra.mxu0 0.0
    %292 = vmatprep.subr.mxu0 0.0
    %293 = vmatpush1.msra.mxu0 0.0
    %294 = vmatprep.subr.mxu0 0.0
    %295 = vmatpush1.msra.mxu0 0.0
    %296 = vmatprep.subr.mxu0 0.0
    %297 = vmatpush1.msra.mxu0 0.0
    %298 = vmatprep.subr.mxu0 0.0
    %299 = vmatpush1.msra.mxu0 %v262
    %300 = vmatprep.subr.mxu0 0.0
    %301 = vmatpush1.msra.mxu0 %v261
    %302 = vmatprep.subr.mxu0 0.0
    %303 = vmatpush1.msra.mxu0 %v260
    %304 = vmatprep.subr.mxu0 0.0
    %305 = vmatpush1.msra.mxu0 %v259
    %306 = vmatprep.subr.mxu0 0.0
    %307 = vmatpush2.msra.mxu0 0.0
    %308 = vmatprep.subr.mxu0 0.0
    %309 = vmatpush2.msra.mxu0 0.0
    %310 = vmatprep.subr.mxu0 0.0
    %311 = vmatpush2.msra.mxu0 0.0
    %312 = vmatprep.subr.mxu0 0.0
    %313 = vmatpush2.msra.mxu0 0.0
    %314 = vmatprep.subr.mxu0 0.0
    %315 = vmatpush2.msra.mxu0 0.0
    %316 = vmatprep.subr.mxu0 0.0
    %317 = vmatpush2.msra.mxu0 0.0
    %318 = vmatprep.subr.mxu0 0.0
    %319 = vmatpush2.msra.mxu0 0.0
    %320 = vmatprep.subr.mxu0 0.0
    %321 = vmatpush2.msra.mxu0 0.0
    %322 = vmatprep.subr.mxu0 0.0
    %323 = vmatpush2.msra.mxu0 0.0
    %324 = vmatprep.subr.mxu0 0.0
    %325 = vmatpush2.msra.mxu0 0.0
    %326 = vmatprep.subr.mxu0 0.0
    %327 = vmatpush2.msra.mxu0 0.0
    %328 = vmatprep.subr.mxu0 0.0
    %329 = vmatpush2.msra.mxu0 0.0
    %330 = vmatprep.subr.mxu0 0.0
    %331 = vmatpush2.msra.mxu0 0.0
    %332 = vmatprep.subr.mxu0 0.0
    %333 = vmatpush2.msra.mxu0 0.0
    %334 = vmatprep.subr.mxu0 0.0
    %335 = vmatpush2.msra.mxu0 0.0
    %336 = vmatprep.subr.mxu0 0.0
    %337 = vmatpush2.msra.mxu0 0.0
    %338 = vmatprep.mubr.f32.mxu0 0.0
    %339 = vmatmul.mubr.f32.gmra.mxu0 %v272
    %v340 = vpop.f32.mrf.mxu0
    %v341 = vadd.f32 %v268, %v340
    %v342 = vpop.f32.mrf.mxu0
    %343 = vdwg.mxu0
    %v344 = vmax.f32 %v341, 0.0
    %v345 = vld [vmem:[%s7] sm:$0x1]
    %v346 = vld [vmem:[#allocation2] sm:$0x1]
    %348 = vset.pattern.permute.xlu0 0
    %349 = vperm.xlu0 %348, %v346
    %v350 = vpop.permute.xlu0 %349
    %v352 = vlaneseq
    %v353 = vshrl.u32 %v352, 7
    %v354 = vsub.s32 0, %v353
    %v355 = vrot.slane %v350, %v354
    %v357 = vsel %vm270, %v345, 0
    %v360 = vsel %vm270, %v344, 0
    %362 = vmatprep.subr.mxu0 0.0
    %363 = vmatpush1.xpose.msra.mxu0 0.0
    %364 = vmatprep.subr.mxu0 0.0
    %365 = vmatpush1.xpose.msra.mxu0 0.0
    %366 = vmatprep.subr.mxu0 0.0
    %367 = vmatpush1.xpose.msra.mxu0 0.0
    %368 = vmatprep.subr.mxu0 0.0
    %369 = vmatpush1.xpose.msra.mxu0 0.0
    %370 = vmatprep.subr.mxu0 0.0
    %371 = vmatpush1.xpose.msra.mxu0 0.0
    %372 = vmatprep.subr.mxu0 0.0
    %373 = vmatpush1.xpose.msra.mxu0 0.0
    %374 = vmatprep.subr.mxu0 0.0
    %375 = vmatpush1.xpose.msra.mxu0 0.0
    %376 = vmatprep.subr.mxu0 0.0
    %377 = vmatpush1.xpose.msra.mxu0 0.0
    %378 = vmatprep.subr.mxu0 0.0
    %379 = vmatpush1.xpose.msra.mxu0 0.0
    %380 = vmatprep.subr.mxu0 0.0
    %381 = vmatpush1.xpose.msra.mxu0 0.0
    %382 = vmatprep.subr.mxu0 0.0
    %383 = vmatpush1.xpose.msra.mxu0 0.0
    %384 = vmatprep.subr.mxu0 0.0
    %385 = vmatpush1.xpose.msra.mxu0 0.0
    %386 = vmatprep.subr.mxu0 0.0
    %387 = vmatpush1.xpose.msra.mxu0 0.0
    %388 = vmatprep.subr.mxu0 0.0
    %389 = vmatpush1.xpose.msra.mxu0 0.0
    %390 = vmatprep.subr.mxu0 0.0
    %391 = vmatpush1.xpose.msra.mxu0 0.0
    %392 = vmatprep.subr.mxu0 0.0
    %393 = vmatpush1.xpose.msra.mxu0 %v360
    %394 = vmatprep.subr.mxu0 0.0
    %395 = vmatpush2.xpose.msra.mxu0 0.0
    %396 = vmatprep.subr.mxu0 0.0
    %397 = vmatpush2.xpose.msra.mxu0 0.0
    %398 = vmatprep.subr.mxu0 0.0
    %399 = vmatpush2.xpose.msra.mxu0 0.0
    %400 = vmatprep.subr.mxu0 0.0
    %401 = vmatpush2.xpose.msra.mxu0 0.0
    %402 = vmatprep.subr.mxu0 0.0
    %403 = vmatpush2.xpose.msra.mxu0 0.0
    %404 = vmatprep.subr.mxu0 0.0
    %405 = vmatpush2.xpose.msra.mxu0 0.0
    %406 = vmatprep.subr.mxu0 0.0
    %407 = vmatpush2.xpose.msra.mxu0 0.0
    %408 = vmatprep.subr.mxu0 0.0
    %409 = vmatpush2.xpose.msra.mxu0 0.0
    %410 = vmatprep.subr.mxu0 0.0
    %411 = vmatpush2.xpose.msra.mxu0 0.0
    %412 = vmatprep.subr.mxu0 0.0
    %413 = vmatpush2.xpose.msra.mxu0 0.0
    %414 = vmatprep.subr.mxu0 0.0
    %415 = vmatpush2.xpose.msra.mxu0 0.0
    %416 = vmatprep.subr.mxu0 0.0
    %417 = vmatpush2.xpose.msra.mxu0 0.0
    %418 = vmatprep.subr.mxu0 0.0
    %419 = vmatpush2.xpose.msra.mxu0 0.0
    %420 = vmatprep.subr.mxu0 0.0
    %421 = vmatpush2.xpose.msra.mxu0 0.0
    %422 = vmatprep.subr.mxu0 0.0
    %423 = vmatpush2.xpose.msra.mxu0 0.0
    %424 = vmatprep.subr.mxu0 0.0
    %425 = vmatpush2.xpose.msra.mxu0 0.0
    %426 = vmatprep.mubr.f32.mxu0 0.0
    %427 = vmatmul.mubr.f32.gmra.mxu0 %v357
    %v428 = vpop.f32.mrf.mxu0
    %v429 = vadd.f32 %v355, %v428
    %v430 = vpop.f32.mrf.mxu0
    %431 = vdwg.mxu0
    %vm432 = vcmask 57344
    %433 = vst.msk [vmem:[#allocation12] sm:$0x1] %vm432, %v429
    // Predicated region
    $region58: #{critic_forward.1} parent=1 // pred_check
      _
    $region59: #{critic_forward.1} parent=1 // pred_check_branch
      %435 = sbr.rel (0) target = $region61
    $region60: #{critic_forward.1} parent=1 // pred_region
      %s437 = ssub.s32 16, 16
      %438 = vsyncadd [#allocation5], %s437
      %s440 = sshll.u32 [#allocation12], 4
      %s441 = int_to_ptr.vmem [resolvable:$true] %s440
      %443 = dma.vmem_to_hbm [thread:$0]  %s441, 16, %s9, [#allocation5]
    $region61: #{critic_forward.1} parent=1 // pred_fallthru
      _
    // Predicated region
    $region62: #{critic_forward.1} parent=1 // pred_check
      _
    $region63: #{critic_forward.1} parent=1 // pred_check_branch
      %445 = sbr.rel (0) target = $region65
    $region64: #{critic_forward.1} parent=1 // pred_region
      %446 = dma.done [#allocation5], 16
    $region65: #{critic_forward.1} parent=1 // pred_fallthru
      _
    %447 = vsyncpa [#allocation4], 1
    %448 = vsyncpa [#allocation7], 1
    %449 = vsyncpa [#allocation10], 1
    %450 = vsyncpa [#allocation5], 1

</llo_original>
